<compile_context>
chip_gen: v7x
topology: tpu7x:2x2x1
jax: 0.10.0
libtpu: 0.0.40
codegen_flags: <defaults>
</compile_context>

<pallas_src>
import functools

import jax
import jax.numpy as jnp
import numpy as np
from jax.experimental import pallas as pl
from jax.experimental.pallas import tpu as pltpu


def _round_up(x, d):
    return ((x + d - 1) // d) * d


def _fold_to_vreg(x):
    """Fold an (tm, tn) f32 tile into an (8, 128) partial with pure VPU adds.

    Slices are (8, 128)-aligned (one vreg each), and the pairwise tree keeps
    the dependency chain short so the 4 VALUs stay busy.  No XLU work.
    """
    tm, tn = x.shape
    blocks = [
        x[r * 8:(r + 1) * 8, c * 128:(c + 1) * 128]
        for r in range(tm // 8)
        for c in range(tn // 128)
    ]
    while len(blocks) > 1:
        nxt = [a + b for a, b in zip(blocks[0::2], blocks[1::2])]
        if len(blocks) % 2:
            nxt.append(blocks[-1])
        blocks = nxt
    return blocks[0]


def _spectral_loss_kernel(w_ref, yi_ref, yjt_ref, ni_ref, nj_ref, o_ref, acc_ref):
    j = pl.program_id(1)

    # Fresh accumulator for every row block (gated on the reduction axis only,
    # so the i axis can be "parallel" / megacore-sharded).
    @pl.when(j == 0)
    def _init():
        acc_ref[...] = jnp.zeros_like(acc_ref)

    yi = yi_ref[...].astype(jnp.float32)       # (tm, k)   rows i
    yjt = yjt_ref[...].astype(jnp.float32)     # (k, tn)   rows j, lane-major
    w = w_ref[...].astype(jnp.float32)         # (tm, tn)  cast in VMEM (free)

    # Gram block on the MXU (no in-kernel transpose needed).
    g = jnp.dot(yi, yjt, preferred_element_type=jnp.float32)   # (tm, tn)

    # Squared pairwise distances (clamped at 0, matching torch.cdist).
    # ni: (tm, 1) precomputed norms, nj: (1, tn) precomputed norms.
    d2 = jnp.maximum(ni_ref[...] + nj_ref[...] - 2.0 * g, 0.0)

    acc_ref[...] += _fold_to_vreg(w * d2)

    @pl.when(j == pl.num_programs(1) - 1)
    def _finalize():
        o_ref[...] = acc_ref[...]


@functools.partial(jax.jit, static_argnames=("is_normalized", "tm", "tn"))
def spectral_cluster_loss(W, Y, is_normalized=False, tm=512, tn=512):
    m, k = Y.shape
    assert W.shape == (m, m)

    Yf = Y.astype(jnp.float32)
    if is_normalized:
        # Degree normalization (cheap row-reduction, kept as JAX glue).
        D = jnp.sum(W, axis=1, dtype=jnp.float32)
        Yf = Yf / jnp.sqrt(D)[:, None]

    n2 = jnp.sum(Yf * Yf, axis=1)                       # (m,) row norms, once

    # Clamp tiles for small m, pad up for ragged m (zero affinity rows/cols
    # contribute exactly zero to the loss).
    tm = min(tm, _round_up(m, 8))
    tn = min(tn, _round_up(m, 128))
    m_r = _round_up(m, tm)
    m_c = _round_up(m, tn)

    W_p = jnp.pad(W, ((0, m_r - m), (0, m_c - m)))      # keep incoming dtype
    Yi = jnp.pad(Yf, ((0, m_r - m), (0, 0)))            # (m_r, k)
    YT = jnp.pad(Yf.T, ((0, 0), (0, m_c - m)))          # (k, m_c) lane-major
    n2c = jnp.pad(n2, (0, m_r - m))[:, None]            # (m_r, 1)
    n2r = jnp.pad(n2, (0, m_c - m))[None, :]            # (1, m_c)

    grid = (m_r // tm, m_c // tn)

    partials = pl.pallas_call(
        _spectral_loss_kernel,
        out_shape=jax.ShapeDtypeStruct((grid[0] * 8, 128), jnp.float32),
        grid_spec=pltpu.PrefetchScalarGridSpec(
            num_scalar_prefetch=0,
            grid=grid,
            in_specs=[
                pl.BlockSpec((tm, tn), lambda i, j: (i, j)),   # W block
                pl.BlockSpec((tm, k), lambda i, j: (i, 0)),    # Y rows (i)
                pl.BlockSpec((k, tn), lambda i, j: (0, j)),    # Y^T cols (j)
                pl.BlockSpec((tm, 1), lambda i, j: (i, 0)),    # ||y_i||^2
                pl.BlockSpec((1, tn), lambda i, j: (0, j)),    # ||y_j||^2
            ],
            out_specs=pl.BlockSpec((8, 128), lambda i, j: (i, 0)),
            scratch_shapes=[pltpu.VMEM((8, 128), jnp.float32)],
        ),
        compiler_params=pltpu.CompilerParams(
            dimension_semantics=("parallel", "arbitrary")),
    )(W_p, Yi, YT, n2c, n2r)

    return jnp.sum(partials) / (m * m)


def _reference(W, Y, is_normalized=False):
    W = W.astype(jnp.float32)
    Y = Y.astype(jnp.float32)
    if is_normalized:
        D = jnp.sum(W, axis=1)
        Y = Y / jnp.sqrt(D)[:, None]
    d2 = jnp.sum((Y[:, None, :] - Y[None, :, :]) ** 2, axis=-1)
    m = Y.shape[0]
    return jnp.sum(W * d2) / (m * m)


if __name__ == "__main__":
    key = jax.random.PRNGKey(0)
    k_w, k_y = jax.random.split(key)

    m, kdim = 256, 32
    # Symmetric, positive affinity matrix.
    A = jax.random.uniform(k_w, (m, m), dtype=jnp.float32)
    W = 0.5 * (A + A.T) + 0.1
    Y = jax.random.normal(k_y, (m, kdim), dtype=jnp.float32)

    loss = jax.block_until_ready(spectral_cluster_loss(W, Y, is_normalized=False))
    loss_norm = jax.block_until_ready(spectral_cluster_loss(W, Y, is_normalized=True))

    ref = _reference(W, Y, is_normalized=False)
    ref_norm = _reference(W, Y, is_normalized=True)

    np.testing.assert_allclose(np.asarray(loss), np.asarray(ref),
                               rtol=1e-4, atol=1e-4)
    np.testing.assert_allclose(np.asarray(loss_norm), np.asarray(ref_norm),
                               rtol=1e-4, atol=1e-4)

    # Ragged-m path (padding): m not a multiple of 8/128.
    m2 = 200
    A2 = jax.random.uniform(k_w, (m2, m2), dtype=jnp.float32)
    W2 = 0.5 * (A2 + A2.T) + 0.1
    Y2 = jax.random.normal(k_y, (m2, kdim), dtype=jnp.float32)
    loss2 = jax.block_until_ready(spectral_cluster_loss(W2, Y2))
    np.testing.assert_allclose(np.asarray(loss2),
                               np.asarray(_reference(W2, Y2)),
                               rtol=1e-4, atol=1e-4)

    print("KERNEL_OK")
</pallas_src>

<mosaic_0001>
module attributes {stable_mosaic.version = 11 : i64} {
  func.func @_spectral_loss_kernel(%arg0: i32, %arg1: i32, %arg2: memref<256x256xf32, #tpu.memory_space<vmem>>, %arg3: memref<256x32xf32, #tpu.memory_space<vmem>>, %arg4: memref<32x256xf32, #tpu.memory_space<vmem>>, %arg5: memref<256x1xf32, #tpu.memory_space<vmem>>, %arg6: memref<1x256xf32, #tpu.memory_space<vmem>>, %arg7: memref<8x128xf32, #tpu.memory_space<vmem>>, %arg8: memref<8x128xf32, #tpu.memory_space<vmem>>) attributes {dimension_semantics = [#tpu.dimension_semantics<parallel>, #tpu.dimension_semantics<arbitrary>], iteration_bounds = array<i64: 1, 1>, scalar_prefetch = 0 : i64, scratch_operands = 1 : i64, tpu.core_type = #tpu.core_type<tc>, window_params = [{transform_indices = @transform_0, window_bounds = array<i64: 256, 256>}, {transform_indices = @transform_1, window_bounds = array<i64: 256, 32>}, {transform_indices = @transform_2, window_bounds = array<i64: 32, 256>}, {transform_indices = @transform_3, window_bounds = array<i64: 256, 1>}, {transform_indices = @transform_4, window_bounds = array<i64: 1, 256>}, {transform_indices = @transform_5, window_bounds = array<i64: 8, 128>}]} {
    %c0_i32 = arith.constant 0 : i32
    %0 = arith.cmpi eq, %arg1, %c0_i32 : i32
    %1 = arith.extui %0 : i1 to i32
    %c0_i32_0 = arith.constant 0 : i32
    %2 = arith.cmpi ne, %1, %c0_i32_0 : i32
    scf.if %2 {
      %cst_18 = arith.constant 0.000000e+00 : f32
      %151 = vector.broadcast %cst_18 : f32 to vector<8x128xf32>
      %c0_19 = arith.constant 0 : index
      %c0_20 = arith.constant 0 : index
      %152 = vector.load %arg8[%c0_19, %c0_20] : memref<8x128xf32, #tpu.memory_space<vmem>>, vector<8x128xf32>
      tpu.vector_store %arg8[%c0_19, %c0_20], %151 {strides = array<i32>} : memref<8x128xf32, #tpu.memory_space<vmem>>, vector<8x128xf32>,
    } else {
    }
    %c0 = arith.constant 0 : index
    %c0_1 = arith.constant 0 : index
    %3 = vector.load %arg3[%c0, %c0_1] : memref<256x32xf32, #tpu.memory_space<vmem>>, vector<256x32xf32>
    %c0_2 = arith.constant 0 : index
    %c0_3 = arith.constant 0 : index
    %4 = vector.load %arg4[%c0_2, %c0_3] : memref<32x256xf32, #tpu.memory_space<vmem>>, vector<32x256xf32>
    %c0_4 = arith.constant 0 : index
    %c0_5 = arith.constant 0 : index
    %5 = vector.load %arg2[%c0_4, %c0_5] : memref<256x256xf32, #tpu.memory_space<vmem>>, vector<256x256xf32>
    %cst = arith.constant dense<0.000000e+00> : vector<256x256xf32>
    %6 = tpu.matmul %3, %4, %cst {dimension_numbers = #tpu.dot_dimension_numbers<[1], [0], [0], [1], [0, 0, 1, 1], [], []>} : vector<256x32xf32>, vector<32x256xf32>, vector<256x256xf32> -> vector<256x256xf32>
    %c0_6 = arith.constant 0 : index
    %c0_7 = arith.constant 0 : index
    %7 = vector.load %arg5[%c0_6, %c0_7] : memref<256x1xf32, #tpu.memory_space<vmem>>, vector<256x1xf32>
    %c0_8 = arith.constant 0 : index
    %c0_9 = arith.constant 0 : index
    %8 = vector.load %arg6[%c0_8, %c0_9] : memref<1x256xf32, #tpu.memory_space<vmem>>, vector<1x256xf32>
    %9 = vector.broadcast %7 : vector<256x1xf32> to vector<256x256xf32>
    %10 = vector.broadcast %8 : vector<1x256xf32> to vector<256x256xf32>
    %11 = arith.addf %9, %10 : vector<256x256xf32>
    %cst_10 = arith.constant 2.000000e+00 : f32
    %12 = vector.broadcast %cst_10 : f32 to vector<256x256xf32>
    %13 = arith.mulf %12, %6 : vector<256x256xf32>
    %14 = arith.subf %11, %13 : vector<256x256xf32>
    %cst_11 = arith.constant 0.000000e+00 : f32
    %15 = vector.broadcast %cst_11 : f32 to vector<256x256xf32>
    %16 = arith.maximumf %14, %15 : vector<256x256xf32>
    %c0_12 = arith.constant 0 : index
    %c0_13 = arith.constant 0 : index
    %17 = vector.load %arg8[%c0_12, %c0_13] : memref<8x128xf32, #tpu.memory_space<vmem>>, vector<8x128xf32>
    %18 = arith.mulf %5, %16 : vector<256x256xf32>
    %19 = vector.extract_strided_slice %18 {offsets = [0, 0], sizes = [8, 128], strides = [1, 1]} : vector<256x256xf32> to vector<8x128xf32>
    %20 = vector.extract_strided_slice %18 {offsets = [0, 128], sizes = [8, 128], strides = [1, 1]} : vector<256x256xf32> to vector<8x128xf32>
    %21 = vector.extract_strided_slice %18 {offsets = [8, 0], sizes = [8, 128], strides = [1, 1]} : vector<256x256xf32> to vector<8x128xf32>
    %22 = vector.extract_strided_slice %18 {offsets = [8, 128], sizes = [8, 128], strides = [1, 1]} : vector<256x256xf32> to vector<8x128xf32>
    %23 = vector.extract_strided_slice %18 {offsets = [16, 0], sizes = [8, 128], strides = [1, 1]} : vector<256x256xf32> to vector<8x128xf32>
    %24 = vector.extract_strided_slice %18 {offsets = [16, 128], sizes = [8, 128], strides = [1, 1]} : vector<256x256xf32> to vector<8x128xf32>
    %25 = vector.extract_strided_slice %18 {offsets = [24, 0], sizes = [8, 128], strides = [1, 1]} : vector<256x256xf32> to vector<8x128xf32>
    %26 = vector.extract_strided_slice %18 {offsets = [24, 128], sizes = [8, 128], strides = [1, 1]} : vector<256x256xf32> to vector<8x128xf32>
    %27 = vector.extract_strided_slice %18 {offsets = [32, 0], sizes = [8, 128], strides = [1, 1]} : vector<256x256xf32> to vector<8x128xf32>
    %28 = vector.extract_strided_slice %18 {offsets = [32, 128], sizes = [8, 128], strides = [1, 1]} : vector<256x256xf32> to vector<8x128xf32>
    %29 = vector.extract_strided_slice %18 {offsets = [40, 0], sizes = [8, 128], strides = [1, 1]} : vector<256x256xf32> to vector<8x128xf32>
    %30 = vector.extract_strided_slice %18 {offsets = [40, 128], sizes = [8, 128], strides = [1, 1]} : vector<256x256xf32> to vector<8x128xf32>
    %31 = vector.extract_strided_slice %18 {offsets = [48, 0], sizes = [8, 128], strides = [1, 1]} : vector<256x256xf32> to vector<8x128xf32>
    %32 = vector.extract_strided_slice %18 {offsets = [48, 128], sizes = [8, 128], strides = [1, 1]} : vector<256x256xf32> to vector<8x128xf32>
    %33 = vector.extract_strided_slice %18 {offsets = [56, 0], sizes = [8, 128], strides = [1, 1]} : vector<256x256xf32> to vector<8x128xf32>
    %34 = vector.extract_strided_slice %18 {offsets = [56, 128], sizes = [8, 128], strides = [1, 1]} : vector<256x256xf32> to vector<8x128xf32>
    %35 = vector.extract_strided_slice %18 {offsets = [64, 0], sizes = [8, 128], strides = [1, 1]} : vector<256x256xf32> to vector<8x128xf32>
    %36 = vector.extract_strided_slice %18 {offsets = [64, 128], sizes = [8, 128], strides = [1, 1]} : vector<256x256xf32> to vector<8x128xf32>
    %37 = vector.extract_strided_slice %18 {offsets = [72, 0], sizes = [8, 128], strides = [1, 1]} : vector<256x256xf32> to vector<8x128xf32>
    %38 = vector.extract_strided_slice %18 {offsets = [72, 128], sizes = [8, 128], strides = [1, 1]} : vector<256x256xf32> to vector<8x128xf32>
    %39 = vector.extract_strided_slice %18 {offsets = [80, 0], sizes = [8, 128], strides = [1, 1]} : vector<256x256xf32> to vector<8x128xf32>
    %40 = vector.extract_strided_slice %18 {offsets = [80, 128], sizes = [8, 128], strides = [1, 1]} : vector<256x256xf32> to vector<8x128xf32>
    %41 = vector.extract_strided_slice %18 {offsets = [88, 0], sizes = [8, 128], strides = [1, 1]} : vector<256x256xf32> to vector<8x128xf32>
    %42 = vector.extract_strided_slice %18 {offsets = [88, 128], sizes = [8, 128], strides = [1, 1]} : vector<256x256xf32> to vector<8x128xf32>
    %43 = vector.extract_strided_slice %18 {offsets = [96, 0], sizes = [8, 128], strides = [1, 1]} : vector<256x256xf32> to vector<8x128xf32>
    %44 = vector.extract_strided_slice %18 {offsets = [96, 128], sizes = [8, 128], strides = [1, 1]} : vector<256x256xf32> to vector<8x128xf32>
    %45 = vector.extract_strided_slice %18 {offsets = [104, 0], sizes = [8, 128], strides = [1, 1]} : vector<256x256xf32> to vector<8x128xf32>
    %46 = vector.extract_strided_slice %18 {offsets = [104, 128], sizes = [8, 128], strides = [1, 1]} : vector<256x256xf32> to vector<8x128xf32>
    %47 = vector.extract_strided_slice %18 {offsets = [112, 0], sizes = [8, 128], strides = [1, 1]} : vector<256x256xf32> to vector<8x128xf32>
    %48 = vector.extract_strided_slice %18 {offsets = [112, 128], sizes = [8, 128], strides = [1, 1]} : vector<256x256xf32> to vector<8x128xf32>
    %49 = vector.extract_strided_slice %18 {offsets = [120, 0], sizes = [8, 128], strides = [1, 1]} : vector<256x256xf32> to vector<8x128xf32>
    %50 = vector.extract_strided_slice %18 {offsets = [120, 128], sizes = [8, 128], strides = [1, 1]} : vector<256x256xf32> to vector<8x128xf32>
    %51 = vector.extract_strided_slice %18 {offsets = [128, 0], sizes = [8, 128], strides = [1, 1]} : vector<256x256xf32> to vector<8x128xf32>
    %52 = vector.extract_strided_slice %18 {offsets = [128, 128], sizes = [8, 128], strides = [1, 1]} : vector<256x256xf32> to vector<8x128xf32>
    %53 = vector.extract_strided_slice %18 {offsets = [136, 0], sizes = [8, 128], strides = [1, 1]} : vector<256x256xf32> to vector<8x128xf32>
    %54 = vector.extract_strided_slice %18 {offsets = [136, 128], sizes = [8, 128], strides = [1, 1]} : vector<256x256xf32> to vector<8x128xf32>
    %55 = vector.extract_strided_slice %18 {offsets = [144, 0], sizes = [8, 128], strides = [1, 1]} : vector<256x256xf32> to vector<8x128xf32>
    %56 = vector.extract_strided_slice %18 {offsets = [144, 128], sizes = [8, 128], strides = [1, 1]} : vector<256x256xf32> to vector<8x128xf32>
    %57 = vector.extract_strided_slice %18 {offsets = [152, 0], sizes = [8, 128], strides = [1, 1]} : vector<256x256xf32> to vector<8x128xf32>
    %58 = vector.extract_strided_slice %18 {offsets = [152, 128], sizes = [8, 128], strides = [1, 1]} : vector<256x256xf32> to vector<8x128xf32>
    %59 = vector.extract_strided_slice %18 {offsets = [160, 0], sizes = [8, 128], strides = [1, 1]} : vector<256x256xf32> to vector<8x128xf32>
    %60 = vector.extract_strided_slice %18 {offsets = [160, 128], sizes = [8, 128], strides = [1, 1]} : vector<256x256xf32> to vector<8x128xf32>
    %61 = vector.extract_strided_slice %18 {offsets = [168, 0], sizes = [8, 128], strides = [1, 1]} : vector<256x256xf32> to vector<8x128xf32>
    %62 = vector.extract_strided_slice %18 {offsets = [168, 128], sizes = [8, 128], strides = [1, 1]} : vector<256x256xf32> to vector<8x128xf32>
    %63 = vector.extract_strided_slice %18 {offsets = [176, 0], sizes = [8, 128], strides = [1, 1]} : vector<256x256xf32> to vector<8x128xf32>
    %64 = vector.extract_strided_slice %18 {offsets = [176, 128], sizes = [8, 128], strides = [1, 1]} : vector<256x256xf32> to vector<8x128xf32>
    %65 = vector.extract_strided_slice %18 {offsets = [184, 0], sizes = [8, 128], strides = [1, 1]} : vector<256x256xf32> to vector<8x128xf32>
    %66 = vector.extract_strided_slice %18 {offsets = [184, 128], sizes = [8, 128], strides = [1, 1]} : vector<256x256xf32> to vector<8x128xf32>
    %67 = vector.extract_strided_slice %18 {offsets = [192, 0], sizes = [8, 128], strides = [1, 1]} : vector<256x256xf32> to vector<8x128xf32>
    %68 = vector.extract_strided_slice %18 {offsets = [192, 128], sizes = [8, 128], strides = [1, 1]} : vector<256x256xf32> to vector<8x128xf32>
    %69 = vector.extract_strided_slice %18 {offsets = [200, 0], sizes = [8, 128], strides = [1, 1]} : vector<256x256xf32> to vector<8x128xf32>
    %70 = vector.extract_strided_slice %18 {offsets = [200, 128], sizes = [8, 128], strides = [1, 1]} : vector<256x256xf32> to vector<8x128xf32>
    %71 = vector.extract_strided_slice %18 {offsets = [208, 0], sizes = [8, 128], strides = [1, 1]} : vector<256x256xf32> to vector<8x128xf32>
    %72 = vector.extract_strided_slice %18 {offsets = [208, 128], sizes = [8, 128], strides = [1, 1]} : vector<256x256xf32> to vector<8x128xf32>
    %73 = vector.extract_strided_slice %18 {offsets = [216, 0], sizes = [8, 128], strides = [1, 1]} : vector<256x256xf32> to vector<8x128xf32>
    %74 = vector.extract_strided_slice %18 {offsets = [216, 128], sizes = [8, 128], strides = [1, 1]} : vector<256x256xf32> to vector<8x128xf32>
    %75 = vector.extract_strided_slice %18 {offsets = [224, 0], sizes = [8, 128], strides = [1, 1]} : vector<256x256xf32> to vector<8x128xf32>
    %76 = vector.extract_strided_slice %18 {offsets = [224, 128], sizes = [8, 128], strides = [1, 1]} : vector<256x256xf32> to vector<8x128xf32>
    %77 = vector.extract_strided_slice %18 {offsets = [232, 0], sizes = [8, 128], strides = [1, 1]} : vector<256x256xf32> to vector<8x128xf32>
    %78 = vector.extract_strided_slice %18 {offsets = [232, 128], sizes = [8, 128], strides = [1, 1]} : vector<256x256xf32> to vector<8x128xf32>
    %79 = vector.extract_strided_slice %18 {offsets = [240, 0], sizes = [8, 128], strides = [1, 1]} : vector<256x256xf32> to vector<8x128xf32>
    %80 = vector.extract_strided_slice %18 {offsets = [240, 128], sizes = [8, 128], strides = [1, 1]} : vector<256x256xf32> to vector<8x128xf32>
    %81 = vector.extract_strided_slice %18 {offsets = [248, 0], sizes = [8, 128], strides = [1, 1]} : vector<256x256xf32> to vector<8x128xf32>
    %82 = vector.extract_strided_slice %18 {offsets = [248, 128], sizes = [8, 128], strides = [1, 1]} : vector<256x256xf32> to vector<8x128xf32>
    %83 = arith.addf %19, %20 : vector<8x128xf32>
    %84 = arith.addf %21, %22 : vector<8x128xf32>
    %85 = arith.addf %23, %24 : vector<8x128xf32>
    %86 = arith.addf %25, %26 : vector<8x128xf32>
    %87 = arith.addf %27, %28 : vector<8x128xf32>
    %88 = arith.addf %29, %30 : vector<8x128xf32>
    %89 = arith.addf %31, %32 : vector<8x128xf32>
    %90 = arith.addf %33, %34 : vector<8x128xf32>
    %91 = arith.addf %35, %36 : vector<8x128xf32>
    %92 = arith.addf %37, %38 : vector<8x128xf32>
    %93 = arith.addf %39, %40 : vector<8x128xf32>
    %94 = arith.addf %41, %42 : vector<8x128xf32>
    %95 = arith.addf %43, %44 : vector<8x128xf32>
    %96 = arith.addf %45, %46 : vector<8x128xf32>
    %97 = arith.addf %47, %48 : vector<8x128xf32>
    %98 = arith.addf %49, %50 : vector<8x128xf32>
    %99 = arith.addf %51, %52 : vector<8x128xf32>
    %100 = arith.addf %53, %54 : vector<8x128xf32>
    %101 = arith.addf %55, %56 : vector<8x128xf32>
    %102 = arith.addf %57, %58 : vector<8x128xf32>
    %103 = arith.addf %59, %60 : vector<8x128xf32>
    %104 = arith.addf %61, %62 : vector<8x128xf32>
    %105 = arith.addf %63, %64 : vector<8x128xf32>
    %106 = arith.addf %65, %66 : vector<8x128xf32>
    %107 = arith.addf %67, %68 : vector<8x128xf32>
    %108 = arith.addf %69, %70 : vector<8x128xf32>
    %109 = arith.addf %71, %72 : vector<8x128xf32>
    %110 = arith.addf %73, %74 : vector<8x128xf32>
    %111 = arith.addf %75, %76 : vector<8x128xf32>
    %112 = arith.addf %77, %78 : vector<8x128xf32>
    %113 = arith.addf %79, %80 : vector<8x128xf32>
    %114 = arith.addf %81, %82 : vector<8x128xf32>
    %115 = arith.addf %83, %84 : vector<8x128xf32>
    %116 = arith.addf %85, %86 : vector<8x128xf32>
    %117 = arith.addf %87, %88 : vector<8x128xf32>
    %118 = arith.addf %89, %90 : vector<8x128xf32>
    %119 = arith.addf %91, %92 : vector<8x128xf32>
    %120 = arith.addf %93, %94 : vector<8x128xf32>
    %121 = arith.addf %95, %96 : vector<8x128xf32>
    %122 = arith.addf %97, %98 : vector<8x128xf32>
    %123 = arith.addf %99, %100 : vector<8x128xf32>
    %124 = arith.addf %101, %102 : vector<8x128xf32>
    %125 = arith.addf %103, %104 : vector<8x128xf32>
    %126 = arith.addf %105, %106 : vector<8x128xf32>
    %127 = arith.addf %107, %108 : vector<8x128xf32>
    %128 = arith.addf %109, %110 : vector<8x128xf32>
    %129 = arith.addf %111, %112 : vector<8x128xf32>
    %130 = arith.addf %113, %114 : vector<8x128xf32>
    %131 = arith.addf %115, %116 : vector<8x128xf32>
    %132 = arith.addf %117, %118 : vector<8x128xf32>
    %133 = arith.addf %119, %120 : vector<8x128xf32>
    %134 = arith.addf %121, %122 : vector<8x128xf32>
    %135 = arith.addf %123, %124 : vector<8x128xf32>
    %136 = arith.addf %125, %126 : vector<8x128xf32>
    %137 = arith.addf %127, %128 : vector<8x128xf32>
    %138 = arith.addf %129, %130 : vector<8x128xf32>
    %139 = arith.addf %131, %132 : vector<8x128xf32>
    %140 = arith.addf %133, %134 : vector<8x128xf32>
    %141 = arith.addf %135, %136 : vector<8x128xf32>
    %142 = arith.addf %137, %138 : vector<8x128xf32>
    %143 = arith.addf %139, %140 : vector<8x128xf32>
    %144 = arith.addf %141, %142 : vector<8x128xf32>
    %145 = arith.addf %143, %144 : vector<8x128xf32>
    %146 = arith.addf %17, %145 : vector<8x128xf32>
    %c0_14 = arith.constant 0 : index
    %c0_15 = arith.constant 0 : index
    %147 = vector.load %arg8[%c0_14, %c0_15] : memref<8x128xf32, #tpu.memory_space<vmem>>, vector<8x128xf32>
    tpu.vector_store %arg8[%c0_14, %c0_15], %146 {strides = array<i32>} : memref<8x128xf32, #tpu.memory_space<vmem>>, vector<8x128xf32>,
    %c0_i32_16 = arith.constant 0 : i32
    %148 = arith.cmpi eq, %arg1, %c0_i32_16 : i32
    %149 = arith.extui %148 : i1 to i32
    %c0_i32_17 = arith.constant 0 : i32
    %150 = arith.cmpi ne, %149, %c0_i32_17 : i32
    scf.if %150 {
      %c0_18 = arith.constant 0 : index
      %c0_19 = arith.constant 0 : index
      %151 = vector.load %arg8[%c0_18, %c0_19] : memref<8x128xf32, #tpu.memory_space<vmem>>, vector<8x128xf32>
      %c0_20 = arith.constant 0 : index
      %c0_21 = arith.constant 0 : index
      %152 = vector.load %arg7[%c0_20, %c0_21] : memref<8x128xf32, #tpu.memory_space<vmem>>, vector<8x128xf32>
      tpu.vector_store %arg7[%c0_20, %c0_21], %151 {strides = array<i32>} : memref<8x128xf32, #tpu.memory_space<vmem>>, vector<8x128xf32>,
    } else {
    }
    return
  }
  func.func @transform_0(%arg0: i32, %arg1: i32) -> (i32, i32) {
    %c0_i32 = arith.constant 0 : i32
    return %arg0, %arg1 : i32, i32
  }
  func.func @transform_1(%arg0: i32, %arg1: i32) -> (i32, i32) {
    %c0_i32 = arith.constant 0 : i32
    %c0_i32_0 = arith.constant 0 : i32
    return %arg0, %c0_i32 : i32, i32
  }
  func.func @transform_2(%arg0: i32, %arg1: i32) -> (i32, i32) {
    %c0_i32 = arith.constant 0 : i32
    %c0_i32_0 = arith.constant 0 : i32
    return %c0_i32, %arg1 : i32, i32
  }
  func.func @transform_3(%arg0: i32, %arg1: i32) -> (i32, i32) {
    %c0_i32 = arith.constant 0 : i32
    %c0_i32_0 = arith.constant 0 : i32
    return %arg0, %c0_i32 : i32, i32
  }
  func.func @transform_4(%arg0: i32, %arg1: i32) -> (i32, i32) {
    %c0_i32 = arith.constant 0 : i32
    %c0_i32_0 = arith.constant 0 : i32
    return %c0_i32, %arg1 : i32, i32
  }
  func.func @transform_5(%arg0: i32, %arg1: i32) -> (i32, i32) {
    %c0_i32 = arith.constant 0 : i32
    %c0_i32_0 = arith.constant 0 : i32
    return %arg0, %c0_i32 : i32, i32
  }
}

</mosaic_0001>

<llo_original>
// kernel: spectral_cluster_loss.1
$region0: #{spectral_cluster_loss.1}
  #allocation0 [shape = 'u32[]', space=smem, size = 0x4, offset = 0x4, fixed_abs, tag = 'smem constant byte address 0x4 - core index']
  #allocation1 [shape = 'u32[144,128]{1,0:T(1,128)}', space=vmem, size = 0x12000, scoped, tag = 'internal scratch']
  #allocation2 [shape = 'f32[8,128]{1,0:T(8,128)}', space=vmem, size = 0x1000, scoped, tag = 'scratch operand']
  %s0 = inlined_call_operand.vmem [shape: f32[256,256], index: 0, kind: input, shape index: {}]
  %s1 = inlined_call_operand.vmem [shape: f32[256,32], index: 1, kind: input, shape index: {}]
  %s2 = inlined_call_operand.vmem [shape: f32[32,256], index: 2, kind: input, shape index: {}]
  %s3 = inlined_call_operand.vmem [shape: f32[256,1], index: 3, kind: input, shape index: {}]
  %s4 = inlined_call_operand.vmem [shape: f32[1,256], index: 4, kind: input, shape index: {}]
  %s5 = inlined_call_operand.vmem [shape: f32[8,128], index: 5, kind: output, shape index: {}]
  %s6 = sld [smem:[#allocation0]]
  $region38: #{spectral_cluster_loss.1} parent=0
    _
  %s8 = ssub.s32 1, %s6
  %s9 = scalar_select 0, %s8, %s6
  // Predicated region
  $region2: #{spectral_cluster_loss.1} parent=0 // pred_check
    _
  $region3: #{spectral_cluster_loss.1} parent=0 // pred_check_branch
    %11 = sbr.rel (0) target = $region5
  $region4: #{spectral_cluster_loss.1} parent=0 // pred_region
    _
  $region5: #{spectral_cluster_loss.1} parent=0 // pred_fallthru
    _
  // Predicated region
  $region6: #{spectral_cluster_loss.1} parent=0 // pred_check
    _
  $region7: #{spectral_cluster_loss.1} parent=0 // pred_check_branch
    %13 = sbr.rel (0) target = $region9
  $region8: #{spectral_cluster_loss.1} parent=0 // pred_region
    _
  $region9: #{spectral_cluster_loss.1} parent=0 // pred_fallthru
    _
  // Predicated region
  $region10: #{spectral_cluster_loss.1} parent=0 // pred_check
    _
  $region11: #{spectral_cluster_loss.1} parent=0 // pred_check_branch
    %15 = sbr.rel (0) target = $region13
  $region12: #{spectral_cluster_loss.1} parent=0 // pred_region
    _
  $region13: #{spectral_cluster_loss.1} parent=0 // pred_fallthru
    _
  // Predicated region
  $region14: #{spectral_cluster_loss.1} parent=0 // pred_check
    _
  $region15: #{spectral_cluster_loss.1} parent=0 // pred_check_branch
    %17 = sbr.rel (0) target = $region17
  $region16: #{spectral_cluster_loss.1} parent=0 // pred_region
    _
  $region17: #{spectral_cluster_loss.1} parent=0 // pred_fallthru
    _
  // Predicated region
  $region18: #{spectral_cluster_loss.1} parent=0 // pred_check
    _
  $region19: #{spectral_cluster_loss.1} parent=0 // pred_check_branch
    %19 = sbr.rel (0) target = $region21
  $region20: #{spectral_cluster_loss.1} parent=0 // pred_region
    _
  $region21: #{spectral_cluster_loss.1} parent=0 // pred_fallthru
    _
  %p20 = scmp.eq.s32.totalorder 0, 0
  // Predicated region
  $region22: #{spectral_cluster_loss.1} parent=0 // pred_check
    %p21 = pneg %p20
  $region23: #{spectral_cluster_loss.1} parent=0 // pred_check_branch
    %23 = sbr.rel (%p21) target = $region25
  $region24: #{spectral_cluster_loss.1} parent=0 // pred_region
    %24 = vst [vmem:[#allocation2] sm:$0xff] 0.0
  $region25: #{spectral_cluster_loss.1} parent=0 // pred_fallthru
    _
  %v25 = vld [vmem:[%s1] sm:$0xff]
  %v26 = vld [vmem:[%s1 + $0x8] sm:$0xff]
  %v27 = vld [vmem:[%s1 + $0x10] sm:$0xff]
  %v28 = vld [vmem:[%s1 + $0x18] sm:$0xff]
  %v29 = vld [vmem:[%s1 + $0x20] sm:$0xff]
  %v30 = vld [vmem:[%s1 + $0x28] sm:$0xff]
  %v31 = vld [vmem:[%s1 + $0x30] sm:$0xff]
  %v32 = vld [vmem:[%s1 + $0x38] sm:$0xff]
  %v33 = vld [vmem:[%s1 + $0x40] sm:$0xff]
  %v34 = vld [vmem:[%s1 + $0x48] sm:$0xff]
  %v35 = vld [vmem:[%s1 + $0x50] sm:$0xff]
  %v36 = vld [vmem:[%s1 + $0x58] sm:$0xff]
  %v37 = vld [vmem:[%s1 + $0x60] sm:$0xff]
  %v38 = vld [vmem:[%s1 + $0x68] sm:$0xff]
  %v39 = vld [vmem:[%s1 + $0x70] sm:$0xff]
  %v40 = vld [vmem:[%s1 + $0x78] sm:$0xff]
  %v41 = vld [vmem:[%s1 + $0x80] sm:$0xff]
  %v42 = vld [vmem:[%s1 + $0x88] sm:$0xff]
  %v43 = vld [vmem:[%s1 + $0x90] sm:$0xff]
  %v44 = vld [vmem:[%s1 + $0x98] sm:$0xff]
  %v45 = vld [vmem:[%s1 + $0xa0] sm:$0xff]
  %v46 = vld [vmem:[%s1 + $0xa8] sm:$0xff]
  %v47 = vld [vmem:[%s1 + $0xb0] sm:$0xff]
  %v48 = vld [vmem:[%s1 + $0xb8] sm:$0xff]
  %v49 = vld [vmem:[%s1 + $0xc0] sm:$0xff]
  %v50 = vld [vmem:[%s1 + $0xc8] sm:$0xff]
  %v51 = vld [vmem:[%s1 + $0xd0] sm:$0xff]
  %v52 = vld [vmem:[%s1 + $0xd8] sm:$0xff]
  %v53 = vld [vmem:[%s1 + $0xe0] sm:$0xff]
  %v54 = vld [vmem:[%s1 + $0xe8] sm:$0xff]
  %v55 = vld [vmem:[%s1 + $0xf0] sm:$0xff]
  %v56 = vld [vmem:[%s1 + $0xf8] sm:$0xff]
  %v57 = vld [vmem:[%s2] sm:$0xff]
  %v58 = vld [vmem:[%s2 + $0x8] sm:$0xff]
  %v59 = vld [vmem:[%s2 + $0x10] sm:$0xff]
  %v60 = vld [vmem:[%s2 + $0x18] sm:$0xff]
  %v61 = vld [vmem:[%s2 + $0x20] sm:$0xff]
  %v62 = vld [vmem:[%s2 + $0x28] sm:$0xff]
  %v63 = vld [vmem:[%s2 + $0x30] sm:$0xff]
  %v64 = vld [vmem:[%s2 + $0x38] sm:$0xff]
  %v65 = vld [vmem:[%s0] sm:$0xff]
  %v66 = vld [vmem:[%s0 + $0x8] sm:$0xff]
  %v67 = vld [vmem:[%s0 + $0x10] sm:$0xff]
  %v68 = vld [vmem:[%s0 + $0x18] sm:$0xff]
  %v69 = vld [vmem:[%s0 + $0x20] sm:$0xff]
  %v70 = vld [vmem:[%s0 + $0x28] sm:$0xff]
  %v71 = vld [vmem:[%s0 + $0x30] sm:$0xff]
  %v72 = vld [vmem:[%s0 + $0x38] sm:$0xff]
  %v73 = vld [vmem:[%s0 + $0x40] sm:$0xff]
  %v74 = vld [vmem:[%s0 + $0x48] sm:$0xff]
  %v75 = vld [vmem:[%s0 + $0x50] sm:$0xff]
  %v76 = vld [vmem:[%s0 + $0x58] sm:$0xff]
  %v77 = vld [vmem:[%s0 + $0x60] sm:$0xff]
  %v78 = vld [vmem:[%s0 + $0x68] sm:$0xff]
  %v79 = vld [vmem:[%s0 + $0x70] sm:$0xff]
  %v80 = vld [vmem:[%s0 + $0x78] sm:$0xff]
  %v81 = vld [vmem:[%s0 + $0x80] sm:$0xff]
  %v82 = vld [vmem:[%s0 + $0x88] sm:$0xff]
  %v83 = vld [vmem:[%s0 + $0x90] sm:$0xff]
  %v84 = vld [vmem:[%s0 + $0x98] sm:$0xff]
  %v85 = vld [vmem:[%s0 + $0xa0] sm:$0xff]
  %v86 = vld [vmem:[%s0 + $0xa8] sm:$0xff]
  %v87 = vld [vmem:[%s0 + $0xb0] sm:$0xff]
  %v88 = vld [vmem:[%s0 + $0xb8] sm:$0xff]
  %v89 = vld [vmem:[%s0 + $0xc0] sm:$0xff]
  %v90 = vld [vmem:[%s0 + $0xc8] sm:$0xff]
  %v91 = vld [vmem:[%s0 + $0xd0] sm:$0xff]
  %v92 = vld [vmem:[%s0 + $0xd8] sm:$0xff]
  %v93 = vld [vmem:[%s0 + $0xe0] sm:$0xff]
  %v94 = vld [vmem:[%s0 + $0xe8] sm:$0xff]
  %v95 = vld [vmem:[%s0 + $0xf0] sm:$0xff]
  %v96 = vld [vmem:[%s0 + $0xf8] sm:$0xff]
  %v97 = vld [vmem:[%s0 + $0x100] sm:$0xff]
  %v98 = vld [vmem:[%s0 + $0x108] sm:$0xff]
  %v99 = vld [vmem:[%s0 + $0x110] sm:$0xff]
  %v100 = vld [vmem:[%s0 + $0x118] sm:$0xff]
  %v101 = vld [vmem:[%s0 + $0x120] sm:$0xff]
  %v102 = vld [vmem:[%s0 + $0x128] sm:$0xff]
  %v103 = vld [vmem:[%s0 + $0x130] sm:$0xff]
  %v104 = vld [vmem:[%s0 + $0x138] sm:$0xff]
  %v105 = vld [vmem:[%s0 + $0x140] sm:$0xff]
  %v106 = vld [vmem:[%s0 + $0x148] sm:$0xff]
  %v107 = vld [vmem:[%s0 + $0x150] sm:$0xff]
  %v108 = vld [vmem:[%s0 + $0x158] sm:$0xff]
  %v109 = vld [vmem:[%s0 + $0x160] sm:$0xff]
  %v110 = vld [vmem:[%s0 + $0x168] sm:$0xff]
  %v111 = vld [vmem:[%s0 + $0x170] sm:$0xff]
  %v112 = vld [vmem:[%s0 + $0x178] sm:$0xff]
  %v113 = vld [vmem:[%s0 + $0x180] sm:$0xff]
  %v114 = vld [vmem:[%s0 + $0x188] sm:$0xff]
  %v115 = vld [vmem:[%s0 + $0x190] sm:$0xff]
  %v116 = vld [vmem:[%s0 + $0x198] sm:$0xff]
  %v117 = vld [vmem:[%s0 + $0x1a0] sm:$0xff]
  %v118 = vld [vmem:[%s0 + $0x1a8] sm:$0xff]
  %v119 = vld [vmem:[%s0 + $0x1b0] sm:$0xff]
  %v120 = vld [vmem:[%s0 + $0x1b8] sm:$0xff]
  %v121 = vld [vmem:[%s0 + $0x1c0] sm:$0xff]
  %v122 = vld [vmem:[%s0 + $0x1c8] sm:$0xff]
  %v123 = vld [vmem:[%s0 + $0x1d0] sm:$0xff]
  %v124 = vld [vmem:[%s0 + $0x1d8] sm:$0xff]
  %v125 = vld [vmem:[%s0 + $0x1e0] sm:$0xff]
  %v126 = vld [vmem:[%s0 + $0x1e8] sm:$0xff]
  %v127 = vld [vmem:[%s0 + $0x1f0] sm:$0xff]
  %v128 = vld [vmem:[%s0 + $0x1f8] sm:$0xff]
  %vm129 = vcmask 261120
  %v131 = vsel %vm129, %v25, 0
  %v134 = vsel %vm129, %v26, 0
  %v137 = vsel %vm129, %v27, 0
  %v140 = vsel %vm129, %v28, 0
  %v143 = vsel %vm129, %v29, 0
  %v146 = vsel %vm129, %v30, 0
  %v149 = vsel %vm129, %v31, 0
  %v152 = vsel %vm129, %v32, 0
  %v155 = vsel %vm129, %v33, 0
  %v158 = vsel %vm129, %v34, 0
  %v161 = vsel %vm129, %v35, 0
  %v164 = vsel %vm129, %v36, 0
  %v167 = vsel %vm129, %v37, 0
  %v170 = vsel %vm129, %v38, 0
  %v173 = vsel %vm129, %v39, 0
  %v176 = vsel %vm129, %v40, 0
  %v179 = vsel %vm129, %v41, 0
  %v182 = vsel %vm129, %v42, 0
  %v185 = vsel %vm129, %v43, 0
  %v188 = vsel %vm129, %v44, 0
  %v191 = vsel %vm129, %v45, 0
  %v194 = vsel %vm129, %v46, 0
  %v197 = vsel %vm129, %v47, 0
  %v200 = vsel %vm129, %v48, 0
  %v203 = vsel %vm129, %v49, 0
  %v206 = vsel %vm129, %v50, 0
  %v209 = vsel %vm129, %v51, 0
  %v212 = vsel %vm129, %v52, 0
  %v215 = vsel %vm129, %v53, 0
  %v218 = vsel %vm129, %v54, 0
  %v221 = vsel %vm129, %v55, 0
  %v224 = vsel %vm129, %v56, 0
  %226 = vmatprep.subr.mxu0 %v58
  %227 = vmatpush1.msra.mxu0 %v57
  %228 = vmatprep.subr.mxu0 %v60
  %229 = vmatpush1.msra.mxu0 %v59
  %230 = vmatprep.subr.mxu0 %v62
  %231 = vmatpush1.msra.mxu0 %v61
  %232 = vmatprep.subr.mxu0 %v64
  %233 = vmatpush1.msra.mxu0 %v63
  %234 = vmatprep.subr.mxu0 0.0
  %235 = vmatpush1.msra.mxu0 0.0
  %236 = vmatprep.subr.mxu0 0.0
  %237 = vmatpush1.msra.mxu0 0.0
  %238 = vmatprep.subr.mxu0 0.0
  %239 = vmatpush1.msra.mxu0 0.0
  %240 = vmatprep.subr.mxu0 0.0
  %241 = vmatpush1.msra.mxu0 0.0
  %242 = vmatprep.subr.mxu0 0.0
  %243 = vmatpush1.msra.mxu0 0.0
  %244 = vmatprep.subr.mxu0 0.0
  %245 = vmatpush1.msra.mxu0 0.0
  %246 = vmatprep.subr.mxu0 0.0
  %247 = vmatpush1.msra.mxu0 0.0
  %248 = vmatprep.subr.mxu0 0.0
  %249 = vmatpush1.msra.mxu0 0.0
  %250 = vmatprep.subr.mxu0 0.0
  %251 = vmatpush1.msra.mxu0 0.0
  %252 = vmatprep.subr.mxu0 0.0
  %253 = vmatpush1.msra.mxu0 0.0
  %254 = vmatprep.subr.mxu0 0.0
  %255 = vmatpush1.msra.mxu0 0.0
  %256 = vmatprep.subr.mxu0 0.0
  %257 = vmatpush1.msra.mxu0 0.0
  %258 = vmatprep.subr.mxu0 0.0
  %259 = vmatpush1.msra.mxu0 0.0
  %260 = vmatprep.subr.mxu0 0.0
  %261 = vmatpush1.msra.mxu0 0.0
  %262 = vmatprep.subr.mxu0 0.0
  %263 = vmatpush1.msra.mxu0 0.0
  %264 = vmatprep.subr.mxu0 0.0
  %265 = vmatpush1.msra.mxu0 0.0
  %266 = vmatprep.subr.mxu0 0.0
  %267 = vmatpush1.msra.mxu0 0.0
  %268 = vmatprep.subr.mxu0 0.0
  %269 = vmatpush1.msra.mxu0 0.0
  %270 = vmatprep.subr.mxu0 0.0
  %271 = vmatpush1.msra.mxu0 0.0
  %272 = vmatprep.subr.mxu0 0.0
  %273 = vmatpush1.msra.mxu0 0.0
  %274 = vmatprep.subr.mxu0 0.0
  %275 = vmatpush1.msra.mxu0 0.0
  %276 = vmatprep.subr.mxu0 0.0
  %277 = vmatpush1.msra.mxu0 0.0
  %278 = vmatprep.subr.mxu0 0.0
  %279 = vmatpush1.msra.mxu0 0.0
  %280 = vmatprep.subr.mxu0 0.0
  %281 = vmatpush1.msra.mxu0 0.0
  %282 = vmatprep.subr.mxu0 0.0
  %283 = vmatpush1.msra.mxu0 0.0
  %284 = vmatprep.subr.mxu0 0.0
  %285 = vmatpush1.msra.mxu0 0.0
  %286 = vmatprep.subr.mxu0 0.0
  %287 = vmatpush1.msra.mxu0 0.0
  %288 = vmatprep.subr.mxu0 0.0
  %289 = vmatpush1.msra.mxu0 0.0
  %290 = vmatprep.mubr.f32.mxu0 0.0
  %291 = vmatmul.mubr.f32.gmra.mrb[0].mxu0 %v131
  %v292 = vpop.f32.mrb[0].mxu0
  %v293 = vadd.f32 0.0, %v292
  %v294 = vpop.f32.mrb[0].mxu0
  %v295 = vadd.f32 0.0, %v294
  %296 = vmatprep.mubr.f32.mxu0 0.0
  %297 = vmatmul.mubr.f32.gmra.mrb[0].mxu0 %v134
  %v298 = vpop.f32.mrb[0].mxu0
  %v299 = vadd.f32 0.0, %v298
  %v300 = vpop.f32.mrb[0].mxu0
  %v301 = vadd.f32 0.0, %v300
  %302 = vmatprep.mubr.f32.mxu0 0.0
  %303 = vmatmul.mubr.f32.gmra.mrb[0].mxu0 %v137
  %v304 = vpop.f32.mrb[0].mxu0
  %v305 = vadd.f32 0.0, %v304
  %v306 = vpop.f32.mrb[0].mxu0
  %v307 = vadd.f32 0.0, %v306
  %308 = vmatprep.mubr.f32.mxu0 0.0
  %309 = vmatmul.mubr.f32.gmra.mrb[0].mxu0 %v140
  %v310 = vpop.f32.mrb[0].mxu0
  %v311 = vadd.f32 0.0, %v310
  %v312 = vpop.f32.mrb[0].mxu0
  %v313 = vadd.f32 0.0, %v312
  %314 = vmatprep.mubr.f32.mxu0 0.0
  %315 = vmatmul.mubr.f32.gmra.mrb[0].mxu0 %v143
  %v316 = vpop.f32.mrb[0].mxu0
  %v317 = vadd.f32 0.0, %v316
  %v318 = vpop.f32.mrb[0].mxu0
  %v319 = vadd.f32 0.0, %v318
  %320 = vmatprep.mubr.f32.mxu0 0.0
  %321 = vmatmul.mubr.f32.gmra.mrb[0].mxu0 %v146
  %v322 = vpop.f32.mrb[0].mxu0
  %v323 = vadd.f32 0.0, %v322
  %v324 = vpop.f32.mrb[0].mxu0
  %v325 = vadd.f32 0.0, %v324
  %326 = vmatprep.mubr.f32.mxu0 0.0
  %327 = vmatmul.mubr.f32.gmra.mrb[0].mxu0 %v149
  %v328 = vpop.f32.mrb[0].mxu0
  %v329 = vadd.f32 0.0, %v328
  %v330 = vpop.f32.mrb[0].mxu0
  %v331 = vadd.f32 0.0, %v330
  %332 = vmatprep.mubr.f32.mxu0 0.0
  %333 = vmatmul.mubr.f32.gmra.mrb[0].mxu0 %v152
  %v334 = vpop.f32.mrb[0].mxu0
  %v335 = vadd.f32 0.0, %v334
  %v336 = vpop.f32.mrb[0].mxu0
  %v337 = vadd.f32 0.0, %v336
  %338 = vmatprep.mubr.f32.mxu0 0.0
  %339 = vmatmul.mubr.f32.gmra.mrb[0].mxu0 %v155
  %v340 = vpop.f32.mrb[0].mxu0
  %v341 = vadd.f32 0.0, %v340
  %v342 = vpop.f32.mrb[0].mxu0
  %v343 = vadd.f32 0.0, %v342
  %344 = vmatprep.mubr.f32.mxu0 0.0
  %345 = vmatmul.mubr.f32.gmra.mrb[0].mxu0 %v158
  %v346 = vpop.f32.mrb[0].mxu0
  %v347 = vadd.f32 0.0, %v346
  %v348 = vpop.f32.mrb[0].mxu0
  %v349 = vadd.f32 0.0, %v348
  %350 = vmatprep.mubr.f32.mxu0 0.0
  %351 = vmatmul.mubr.f32.gmra.mrb[0].mxu0 %v161
  %v352 = vpop.f32.mrb[0].mxu0
  %v353 = vadd.f32 0.0, %v352
  %v354 = vpop.f32.mrb[0].mxu0
  %v355 = vadd.f32 0.0, %v354
  %356 = vmatprep.mubr.f32.mxu0 0.0
  %357 = vmatmul.mubr.f32.gmra.mrb[0].mxu0 %v164
  %v358 = vpop.f32.mrb[0].mxu0
  %v359 = vadd.f32 0.0, %v358
  %v360 = vpop.f32.mrb[0].mxu0
  %v361 = vadd.f32 0.0, %v360
  %362 = vmatprep.mubr.f32.mxu0 0.0
  %363 = vmatmul.mubr.f32.gmra.mrb[0].mxu0 %v167
  %v364 = vpop.f32.mrb[0].mxu0
  %v365 = vadd.f32 0.0, %v364
  %v366 = vpop.f32.mrb[0].mxu0
  %v367 = vadd.f32 0.0, %v366
  %368 = vmatprep.mubr.f32.mxu0 0.0
  %369 = vmatmul.mubr.f32.gmra.mrb[0].mxu0 %v170
  %v370 = vpop.f32.mrb[0].mxu0
  %v371 = vadd.f32 0.0, %v370
  %v372 = vpop.f32.mrb[0].mxu0
  %v373 = vadd.f32 0.0, %v372
  %374 = vmatprep.mubr.f32.mxu0 0.0
  %375 = vmatmul.mubr.f32.gmra.mrb[0].mxu0 %v173
  %v376 = vpop.f32.mrb[0].mxu0
  %v377 = vadd.f32 0.0, %v376
  %v378 = vpop.f32.mrb[0].mxu0
  %v379 = vadd.f32 0.0, %v378
  %380 = vmatprep.mubr.f32.mxu0 0.0
  %381 = vmatmul.mubr.f32.gmra.mrb[0].mxu0 %v176
  %v382 = vpop.f32.mrb[0].mxu0
  %v383 = vadd.f32 0.0, %v382
  %v384 = vpop.f32.mrb[0].mxu0
  %v385 = vadd.f32 0.0, %v384
  %386 = vmatprep.mubr.f32.mxu0 0.0
  %387 = vmatmul.mubr.f32.gmra.mrb[0].mxu0 %v179
  %v388 = vpop.f32.mrb[0].mxu0
  %v389 = vadd.f32 0.0, %v388
  %v390 = vpop.f32.mrb[0].mxu0
  %v391 = vadd.f32 0.0, %v390
  %392 = vmatprep.mubr.f32.mxu0 0.0
  %393 = vmatmul.mubr.f32.gmra.mrb[0].mxu0 %v182
  %v394 = vpop.f32.mrb[0].mxu0
  %v395 = vadd.f32 0.0, %v394
  %v396 = vpop.f32.mrb[0].mxu0
  %v397 = vadd.f32 0.0, %v396
  %398 = vmatprep.mubr.f32.mxu0 0.0
  %399 = vmatmul.mubr.f32.gmra.mrb[0].mxu0 %v185
  %v400 = vpop.f32.mrb[0].mxu0
  %v401 = vadd.f32 0.0, %v400
  %v402 = vpop.f32.mrb[0].mxu0
  %v403 = vadd.f32 0.0, %v402
  %404 = vmatprep.mubr.f32.mxu0 0.0
  %405 = vmatmul.mubr.f32.gmra.mrb[0].mxu0 %v188
  %v406 = vpop.f32.mrb[0].mxu0
  %v407 = vadd.f32 0.0, %v406
  %v408 = vpop.f32.mrb[0].mxu0
  %v409 = vadd.f32 0.0, %v408
  %410 = vmatprep.mubr.f32.mxu0 0.0
  %411 = vmatmul.mubr.f32.gmra.mrb[0].mxu0 %v191
  %v412 = vpop.f32.mrb[0].mxu0
  %v413 = vadd.f32 0.0, %v412
  %v414 = vpop.f32.mrb[0].mxu0
  %v415 = vadd.f32 0.0, %v414
  %416 = vmatprep.mubr.f32.mxu0 0.0
  %417 = vmatmul.mubr.f32.gmra.mrb[0].mxu0 %v194
  %v418 = vpop.f32.mrb[0].mxu0
  %v419 = vadd.f32 0.0, %v418
  %v420 = vpop.f32.mrb[0].mxu0
  %v421 = vadd.f32 0.0, %v420
  %422 = vmatprep.mubr.f32.mxu0 0.0
  %423 = vmatmul.mubr.f32.gmra.mrb[0].mxu0 %v197
  %v424 = vpop.f32.mrb[0].mxu0
  %v425 = vadd.f32 0.0, %v424
  %v426 = vpop.f32.mrb[0].mxu0
  %v427 = vadd.f32 0.0, %v426
  %428 = vmatprep.mubr.f32.mxu0 0.0
  %429 = vmatmul.mubr.f32.gmra.mrb[0].mxu0 %v200
  %v430 = vpop.f32.mrb[0].mxu0
  %v431 = vadd.f32 0.0, %v430
  %v432 = vpop.f32.mrb[0].mxu0
  %v433 = vadd.f32 0.0, %v432
  %434 = vmatprep.mubr.f32.mxu0 0.0
  %435 = vmatmul.mubr.f32.gmra.mrb[0].mxu0 %v203
  %v436 = vpop.f32.mrb[0].mxu0
  %v437 = vadd.f32 0.0, %v436
  %v438 = vpop.f32.mrb[0].mxu0
  %v439 = vadd.f32 0.0, %v438
  %440 = vmatprep.mubr.f32.mxu0 0.0
  %441 = vmatmul.mubr.f32.gmra.mrb[0].mxu0 %v206
  %v442 = vpop.f32.mrb[0].mxu0
  %v443 = vadd.f32 0.0, %v442
  %v444 = vpop.f32.mrb[0].mxu0
  %v445 = vadd.f32 0.0, %v444
  %446 = vmatprep.mubr.f32.mxu0 0.0
  %447 = vmatmul.mubr.f32.gmra.mrb[0].mxu0 %v209
  %v448 = vpop.f32.mrb[0].mxu0
  %v449 = vadd.f32 0.0, %v448
  %v450 = vpop.f32.mrb[0].mxu0
  %v451 = vadd.f32 0.0, %v450
  %452 = vmatprep.mubr.f32.mxu0 0.0
  %453 = vmatmul.mubr.f32.gmra.mrb[0].mxu0 %v212
  %v454 = vpop.f32.mrb[0].mxu0
  %v455 = vadd.f32 0.0, %v454
  %v456 = vpop.f32.mrb[0].mxu0
  %v457 = vadd.f32 0.0, %v456
  %458 = vmatprep.mubr.f32.mxu0 0.0
  %459 = vmatmul.mubr.f32.gmra.mrb[0].mxu0 %v215
  %v460 = vpop.f32.mrb[0].mxu0
  %v461 = vadd.f32 0.0, %v460
  %v462 = vpop.f32.mrb[0].mxu0
  %v463 = vadd.f32 0.0, %v462
  %464 = vmatprep.mubr.f32.mxu0 0.0
  %465 = vmatmul.mubr.f32.gmra.mrb[0].mxu0 %v218
  %v466 = vpop.f32.mrb[0].mxu0
  %v467 = vadd.f32 0.0, %v466
  %v468 = vpop.f32.mrb[0].mxu0
  %v469 = vadd.f32 0.0, %v468
  %470 = vmatprep.mubr.f32.mxu0 0.0
  %471 = vmatmul.mubr.f32.gmra.mrb[0].mxu0 %v221
  %v472 = vpop.f32.mrb[0].mxu0
  %v473 = vadd.f32 0.0, %v472
  %v474 = vpop.f32.mrb[0].mxu0
  %v475 = vadd.f32 0.0, %v474
  %476 = vmatprep.mubr.f32.mxu0 0.0
  %477 = vmatmul.mubr.f32.gmra.mrb[0].mxu0 %v224
  %v478 = vpop.f32.mrb[0].mxu0
  %v479 = vadd.f32 0.0, %v478
  %v480 = vpop.f32.mrb[0].mxu0
  %v481 = vadd.f32 0.0, %v480
  %482 = vdwg.mxu0
  %v483 = vld [vmem:[%s3] sm:$0xff]
  %v484 = vld [vmem:[%s3 + $0x8] sm:$0xff]
  %v485 = vld [vmem:[%s3 + $0x10] sm:$0xff]
  %v486 = vld [vmem:[%s3 + $0x18] sm:$0xff]
  %v487 = vld [vmem:[%s3 + $0x20] sm:$0xff]
  %v488 = vld [vmem:[%s3 + $0x28] sm:$0xff]
  %v489 = vld [vmem:[%s3 + $0x30] sm:$0xff]
  %v490 = vld [vmem:[%s3 + $0x38] sm:$0xff]
  %v491 = vld [vmem:[%s3 + $0x40] sm:$0xff]
  %v492 = vld [vmem:[%s3 + $0x48] sm:$0xff]
  %v493 = vld [vmem:[%s3 + $0x50] sm:$0xff]
  %v494 = vld [vmem:[%s3 + $0x58] sm:$0xff]
  %v495 = vld [vmem:[%s3 + $0x60] sm:$0xff]
  %v496 = vld [vmem:[%s3 + $0x68] sm:$0xff]
  %v497 = vld [vmem:[%s3 + $0x70] sm:$0xff]
  %v498 = vld [vmem:[%s3 + $0x78] sm:$0xff]
  %v499 = vld [vmem:[%s3 + $0x80] sm:$0xff]
  %v500 = vld [vmem:[%s3 + $0x88] sm:$0xff]
  %v501 = vld [vmem:[%s3 + $0x90] sm:$0xff]
  %v502 = vld [vmem:[%s3 + $0x98] sm:$0xff]
  %v503 = vld [vmem:[%s3 + $0xa0] sm:$0xff]
  %v504 = vld [vmem:[%s3 + $0xa8] sm:$0xff]
  %v505 = vld [vmem:[%s3 + $0xb0] sm:$0xff]
  %v506 = vld [vmem:[%s3 + $0xb8] sm:$0xff]
  %v507 = vld [vmem:[%s3 + $0xc0] sm:$0xff]
  %v508 = vld [vmem:[%s3 + $0xc8] sm:$0xff]
  %v509 = vld [vmem:[%s3 + $0xd0] sm:$0xff]
  %v510 = vld [vmem:[%s3 + $0xd8] sm:$0xff]
  %v511 = vld [vmem:[%s3 + $0xe0] sm:$0xff]
  %v512 = vld [vmem:[%s3 + $0xe8] sm:$0xff]
  %v513 = vld [vmem:[%s3 + $0xf0] sm:$0xff]
  %v514 = vld [vmem:[%s3 + $0xf8] sm:$0xff]
  %v515 = vld [vmem:[%s4] sm:$0x3]
  %517 = vset.pattern.permute.xlu0 0
  %518 = vperm.xlu0 %517, %v483
  %v519 = vpop.permute.xlu0 %518
  %522 = vset.pattern.permute.xlu0 0
  %523 = vperm.xlu0 %522, %v484
  %v524 = vpop.permute.xlu0 %523
  %527 = vset.pattern.permute.xlu0 0
  %528 = vperm.xlu0 %527, %v485
  %v529 = vpop.permute.xlu0 %528
  %532 = vset.pattern.permute.xlu0 0
  %533 = vperm.xlu0 %532, %v486
  %v534 = vpop.permute.xlu0 %533
  %537 = vset.pattern.permute.xlu0 0
  %538 = vperm.xlu0 %537, %v487
  %v539 = vpop.permute.xlu0 %538
  %542 = vset.pattern.permute.xlu0 0
  %543 = vperm.xlu0 %542, %v488
  %v544 = vpop.permute.xlu0 %543
  %547 = vset.pattern.permute.xlu0 0
  %548 = vperm.xlu0 %547, %v489
  %v549 = vpop.permute.xlu0 %548
  %552 = vset.pattern.permute.xlu0 0
  %553 = vperm.xlu0 %552, %v490
  %v554 = vpop.permute.xlu0 %553
  %557 = vset.pattern.permute.xlu0 0
  %558 = vperm.xlu0 %557, %v491
  %v559 = vpop.permute.xlu0 %558
  %562 = vset.pattern.permute.xlu0 0
  %563 = vperm.xlu0 %562, %v492
  %v564 = vpop.permute.xlu0 %563
  %567 = vset.pattern.permute.xlu0 0
  %568 = vperm.xlu0 %567, %v493
  %v569 = vpop.permute.xlu0 %568
  %572 = vset.pattern.permute.xlu0 0
  %573 = vperm.xlu0 %572, %v494
  %v574 = vpop.permute.xlu0 %573
  %577 = vset.pattern.permute.xlu0 0
  %578 = vperm.xlu0 %577, %v495
  %v579 = vpop.permute.xlu0 %578
  %582 = vset.pattern.permute.xlu0 0
  %583 = vperm.xlu0 %582, %v496
  %v584 = vpop.permute.xlu0 %583
  %587 = vset.pattern.permute.xlu0 0
  %588 = vperm.xlu0 %587, %v497
  %v589 = vpop.permute.xlu0 %588
  %592 = vset.pattern.permute.xlu0 0
  %593 = vperm.xlu0 %592, %v498
  %v594 = vpop.permute.xlu0 %593
  %597 = vset.pattern.permute.xlu0 0
  %598 = vperm.xlu0 %597, %v499
  %v599 = vpop.permute.xlu0 %598
  %602 = vset.pattern.permute.xlu0 0
  %603 = vperm.xlu0 %602, %v500
  %v604 = vpop.permute.xlu0 %603
  %607 = vset.pattern.permute.xlu0 0
  %608 = vperm.xlu0 %607, %v501
  %v609 = vpop.permute.xlu0 %608
  %612 = vset.pattern.permute.xlu0 0
  %613 = vperm.xlu0 %612, %v502
  %v614 = vpop.permute.xlu0 %613
  %617 = vset.pattern.permute.xlu0 0
  %618 = vperm.xlu0 %617, %v503
  %v619 = vpop.permute.xlu0 %618
  %622 = vset.pattern.permute.xlu0 0
  %623 = vperm.xlu0 %622, %v504
  %v624 = vpop.permute.xlu0 %623
  %627 = vset.pattern.permute.xlu0 0
  %628 = vperm.xlu0 %627, %v505
  %v629 = vpop.permute.xlu0 %628
  %632 = vset.pattern.permute.xlu0 0
  %633 = vperm.xlu0 %632, %v506
  %v634 = vpop.permute.xlu0 %633
  %637 = vset.pattern.permute.xlu0 0
  %638 = vperm.xlu0 %637, %v507
  %v639 = vpop.permute.xlu0 %638
  %642 = vset.pattern.permute.xlu0 0
  %643 = vperm.xlu0 %642, %v508
  %v644 = vpop.permute.xlu0 %643
  %647 = vset.pattern.permute.xlu0 0
  %648 = vperm.xlu0 %647, %v509
  %v649 = vpop.permute.xlu0 %648
  %652 = vset.pattern.permute.xlu0 0
  %653 = vperm.xlu0 %652, %v510
  %v654 = vpop.permute.xlu0 %653
  %657 = vset.pattern.permute.xlu0 0
  %658 = vperm.xlu0 %657, %v511
  %v659 = vpop.permute.xlu0 %658
  %662 = vset.pattern.permute.xlu0 0
  %663 = vperm.xlu0 %662, %v512
  %v664 = vpop.permute.xlu0 %663
  %667 = vset.pattern.permute.xlu0 0
  %668 = vperm.xlu0 %667, %v513
  %v669 = vpop.permute.xlu0 %668
  %672 = vset.pattern.permute.xlu0 0
  %673 = vperm.xlu0 %672, %v514
  %v674 = vpop.permute.xlu0 %673
  %v677 = vlaneseq
  %v678 = vshrl.u32 %v677, 7
  %v679 = vsub.s32 0, %v678
  %v680 = vrot.slane %v515, %v679
  %v681 = vlaneseq
  %v682 = vshrl.u32 %v681, 7
  %v683 = vsub.s32 1, %v682
  %v684 = vrot.slane %v515, %v683
  %v687 = vadd.f32 %v519, %v680
  %v688 = vadd.f32 %v519, %v684
  %v689 = vadd.f32 %v524, %v680
  %v690 = vadd.f32 %v524, %v684
  %v691 = vadd.f32 %v529, %v680
  %v692 = vadd.f32 %v529, %v684
  %v693 = vadd.f32 %v534, %v680
  %v694 = vadd.f32 %v534, %v684
  %v695 = vadd.f32 %v539, %v680
  %v696 = vadd.f32 %v539, %v684
  %v697 = vadd.f32 %v544, %v680
  %v698 = vadd.f32 %v544, %v684
  %v699 = vadd.f32 %v549, %v680
  %v700 = vadd.f32 %v549, %v684
  %v701 = vadd.f32 %v554, %v680
  %v702 = vadd.f32 %v554, %v684
  %v703 = vadd.f32 %v559, %v680
  %v704 = vadd.f32 %v559, %v684
  %v705 = vadd.f32 %v564, %v680
  %v706 = vadd.f32 %v564, %v684
  %v707 = vadd.f32 %v569, %v680
  %v708 = vadd.f32 %v569, %v684
  %v709 = vadd.f32 %v574, %v680
  %v710 = vadd.f32 %v574, %v684
  %v711 = vadd.f32 %v579, %v680
  %v712 = vadd.f32 %v579, %v684
  %v713 = vadd.f32 %v584, %v680
  %v714 = vadd.f32 %v584, %v684
  %v715 = vadd.f32 %v589, %v680
  %v716 = vadd.f32 %v589, %v684
  %v717 = vadd.f32 %v594, %v680
  %v718 = vadd.f32 %v594, %v684
  %v719 = vadd.f32 %v599, %v680
  %v720 = vadd.f32 %v599, %v684
  %v721 = vadd.f32 %v604, %v680
  %v722 = vadd.f32 %v604, %v684
  %v723 = vadd.f32 %v609, %v680
  %v724 = vadd.f32 %v609, %v684
  %v725 = vadd.f32 %v614, %v680
  %v726 = vadd.f32 %v614, %v684
  %v727 = vadd.f32 %v619, %v680
  %v728 = vadd.f32 %v619, %v684
  %v729 = vadd.f32 %v624, %v680
  %v730 = vadd.f32 %v624, %v684
  %v731 = vadd.f32 %v629, %v680
  %v732 = vadd.f32 %v629, %v684
  %v733 = vadd.f32 %v634, %v680
  %v734 = vadd.f32 %v634, %v684
  %v735 = vadd.f32 %v639, %v680
  %v736 = vadd.f32 %v639, %v684
  %v737 = vadd.f32 %v644, %v680
  %v738 = vadd.f32 %v644, %v684
  %v739 = vadd.f32 %v649, %v680
  %v740 = vadd.f32 %v649, %v684
  %v741 = vadd.f32 %v654, %v680
  %v742 = vadd.f32 %v654, %v684
  %v743 = vadd.f32 %v659, %v680
  %v744 = vadd.f32 %v659, %v684
  %v745 = vadd.f32 %v664, %v680
  %v746 = vadd.f32 %v664, %v684
  %v747 = vadd.f32 %v669, %v680
  %v748 = vadd.f32 %v669, %v684
  %v749 = vadd.f32 %v674, %v680
  %v750 = vadd.f32 %v674, %v684
  %v751 = vmul.f32 %v293, 2.0
  %v752 = vmul.f32 %v295, 2.0
  %v753 = vmul.f32 %v299, 2.0
  %v754 = vmul.f32 %v301, 2.0
  %v755 = vmul.f32 %v305, 2.0
  %v756 = vmul.f32 %v307, 2.0
  %v757 = vmul.f32 %v311, 2.0
  %v758 = vmul.f32 %v313, 2.0
  %v759 = vmul.f32 %v317, 2.0
  %v760 = vmul.f32 %v319, 2.0
  %v761 = vmul.f32 %v323, 2.0
  %v762 = vmul.f32 %v325, 2.0
  %v763 = vmul.f32 %v329, 2.0
  %v764 = vmul.f32 %v331, 2.0
  %v765 = vmul.f32 %v335, 2.0
  %v766 = vmul.f32 %v337, 2.0
  %v767 = vmul.f32 %v341, 2.0
  %v768 = vmul.f32 %v343, 2.0
  %v769 = vmul.f32 %v347, 2.0
  %v770 = vmul.f32 %v349, 2.0
  %v771 = vmul.f32 %v353, 2.0
  %v772 = vmul.f32 %v355, 2.0
  %v773 = vmul.f32 %v359, 2.0
  %v774 = vmul.f32 %v361, 2.0
  %v775 = vmul.f32 %v365, 2.0
  %v776 = vmul.f32 %v367, 2.0
  %v777 = vmul.f32 %v371, 2.0
  %v778 = vmul.f32 %v373, 2.0
  %v779 = vmul.f32 %v377, 2.0
  %v780 = vmul.f32 %v379, 2.0
  %v781 = vmul.f32 %v383, 2.0
  %v782 = vmul.f32 %v385, 2.0
  %v783 = vmul.f32 %v389, 2.0
  %v784 = vmul.f32 %v391, 2.0
  %v785 = vmul.f32 %v395, 2.0
  %v786 = vmul.f32 %v397, 2.0
  %v787 = vmul.f32 %v401, 2.0
  %v788 = vmul.f32 %v403, 2.0
  %v789 = vmul.f32 %v407, 2.0
  %v790 = vmul.f32 %v409, 2.0
  %v791 = vmul.f32 %v413, 2.0
  %v792 = vmul.f32 %v415, 2.0
  %v793 = vmul.f32 %v419, 2.0
  %v794 = vmul.f32 %v421, 2.0
  %v795 = vmul.f32 %v425, 2.0
  %v796 = vmul.f32 %v427, 2.0
  %v797 = vmul.f32 %v431, 2.0
  %v798 = vmul.f32 %v433, 2.0
  %v799 = vmul.f32 %v437, 2.0
  %v800 = vmul.f32 %v439, 2.0
  %v801 = vmul.f32 %v443, 2.0
  %v802 = vmul.f32 %v445, 2.0
  %v803 = vmul.f32 %v449, 2.0
  %v804 = vmul.f32 %v451, 2.0
  %v805 = vmul.f32 %v455, 2.0
  %v806 = vmul.f32 %v457, 2.0
  %v807 = vmul.f32 %v461, 2.0
  %v808 = vmul.f32 %v463, 2.0
  %v809 = vmul.f32 %v467, 2.0
  %v810 = vmul.f32 %v469, 2.0
  %v811 = vmul.f32 %v473, 2.0
  %v812 = vmul.f32 %v475, 2.0
  %v813 = vmul.f32 %v479, 2.0
  %v814 = vmul.f32 %v481, 2.0
  %v815 = vsub.f32 %v687, %v751
  %v816 = vsub.f32 %v688, %v752
  %v817 = vsub.f32 %v689, %v753
  %v818 = vsub.f32 %v690, %v754
  %v819 = vsub.f32 %v691, %v755
  %v820 = vsub.f32 %v692, %v756
  %v821 = vsub.f32 %v693, %v757
  %v822 = vsub.f32 %v694, %v758
  %v823 = vsub.f32 %v695, %v759
  %v824 = vsub.f32 %v696, %v760
  %v825 = vsub.f32 %v697, %v761
  %v826 = vsub.f32 %v698, %v762
  %v827 = vsub.f32 %v699, %v763
  %v828 = vsub.f32 %v700, %v764
  %v829 = vsub.f32 %v701, %v765
  %v830 = vsub.f32 %v702, %v766
  %v831 = vsub.f32 %v703, %v767
  %v832 = vsub.f32 %v704, %v768
  %v833 = vsub.f32 %v705, %v769
  %v834 = vsub.f32 %v706, %v770
  %v835 = vsub.f32 %v707, %v771
  %v836 = vsub.f32 %v708, %v772
  %v837 = vsub.f32 %v709, %v773
  %v838 = vsub.f32 %v710, %v774
  %v839 = vsub.f32 %v711, %v775
  %v840 = vsub.f32 %v712, %v776
  %v841 = vsub.f32 %v713, %v777
  %v842 = vsub.f32 %v714, %v778
  %v843 = vsub.f32 %v715, %v779
  %v844 = vsub.f32 %v716, %v780
  %v845 = vsub.f32 %v717, %v781
  %v846 = vsub.f32 %v718, %v782
  %v847 = vsub.f32 %v719, %v783
  %v848 = vsub.f32 %v720, %v784
  %v849 = vsub.f32 %v721, %v785
  %v850 = vsub.f32 %v722, %v786
  %v851 = vsub.f32 %v723, %v787
  %v852 = vsub.f32 %v724, %v788
  %v853 = vsub.f32 %v725, %v789
  %v854 = vsub.f32 %v726, %v790
  %v855 = vsub.f32 %v727, %v791
  %v856 = vsub.f32 %v728, %v792
  %v857 = vsub.f32 %v729, %v793
  %v858 = vsub.f32 %v730, %v794
  %v859 = vsub.f32 %v731, %v795
  %v860 = vsub.f32 %v732, %v796
  %v861 = vsub.f32 %v733, %v797
  %v862 = vsub.f32 %v734, %v798
  %v863 = vsub.f32 %v735, %v799
  %v864 = vsub.f32 %v736, %v800
  %v865 = vsub.f32 %v737, %v801
  %v866 = vsub.f32 %v738, %v802
  %v867 = vsub.f32 %v739, %v803
  %v868 = vsub.f32 %v740, %v804
  %v869 = vsub.f32 %v741, %v805
  %v870 = vsub.f32 %v742, %v806
  %v871 = vsub.f32 %v743, %v807
  %v872 = vsub.f32 %v744, %v808
  %v873 = vsub.f32 %v745, %v809
  %v874 = vsub.f32 %v746, %v810
  %v875 = vsub.f32 %v747, %v811
  %v876 = vsub.f32 %v748, %v812
  %v877 = vsub.f32 %v749, %v813
  %v878 = vsub.f32 %v750, %v814
  %v879 = vmax.f32 %v815, 0.0
  %v880 = vmax.f32 %v816, 0.0
  %v881 = vmax.f32 %v817, 0.0
  %v882 = vmax.f32 %v818, 0.0
  %v883 = vmax.f32 %v819, 0.0
  %v884 = vmax.f32 %v820, 0.0
  %v885 = vmax.f32 %v821, 0.0
  %v886 = vmax.f32 %v822, 0.0
  %v887 = vmax.f32 %v823, 0.0
  %v888 = vmax.f32 %v824, 0.0
  %v889 = vmax.f32 %v825, 0.0
  %v890 = vmax.f32 %v826, 0.0
  %v891 = vmax.f32 %v827, 0.0
  %v892 = vmax.f32 %v828, 0.0
  %v893 = vmax.f32 %v829, 0.0
  %v894 = vmax.f32 %v830, 0.0
  %v895 = vmax.f32 %v831, 0.0
  %v896 = vmax.f32 %v832, 0.0
  %v897 = vmax.f32 %v833, 0.0
  %v898 = vmax.f32 %v834, 0.0
  %v899 = vmax.f32 %v835, 0.0
  %v900 = vmax.f32 %v836, 0.0
  %v901 = vmax.f32 %v837, 0.0
  %v902 = vmax.f32 %v838, 0.0
  %v903 = vmax.f32 %v839, 0.0
  %v904 = vmax.f32 %v840, 0.0
  %v905 = vmax.f32 %v841, 0.0
  %v906 = vmax.f32 %v842, 0.0
  %v907 = vmax.f32 %v843, 0.0
  %v908 = vmax.f32 %v844, 0.0
  %v909 = vmax.f32 %v845, 0.0
  %v910 = vmax.f32 %v846, 0.0
  %v911 = vmax.f32 %v847, 0.0
  %v912 = vmax.f32 %v848, 0.0
  %v913 = vmax.f32 %v849, 0.0
  %v914 = vmax.f32 %v850, 0.0
  %v915 = vmax.f32 %v851, 0.0
  %v916 = vmax.f32 %v852, 0.0
  %v917 = vmax.f32 %v853, 0.0
  %v918 = vmax.f32 %v854, 0.0
  %v919 = vmax.f32 %v855, 0.0
  %v920 = vmax.f32 %v856, 0.0
  %v921 = vmax.f32 %v857, 0.0
  %v922 = vmax.f32 %v858, 0.0
  %v923 = vmax.f32 %v859, 0.0
  %v924 = vmax.f32 %v860, 0.0
  %v925 = vmax.f32 %v861, 0.0
  %v926 = vmax.f32 %v862, 0.0
  %v927 = vmax.f32 %v863, 0.0
  %v928 = vmax.f32 %v864, 0.0
  %v929 = vmax.f32 %v865, 0.0
  %v930 = vmax.f32 %v866, 0.0
  %v931 = vmax.f32 %v867, 0.0
  %v932 = vmax.f32 %v868, 0.0
  %v933 = vmax.f32 %v869, 0.0
  %v934 = vmax.f32 %v870, 0.0
  %v935 = vmax.f32 %v871, 0.0
  %v936 = vmax.f32 %v872, 0.0
  %v937 = vmax.f32 %v873, 0.0
  %v938 = vmax.f32 %v874, 0.0
  %v939 = vmax.f32 %v875, 0.0
  %v940 = vmax.f32 %v876, 0.0
  %v941 = vmax.f32 %v877, 0.0
  %v942 = vmax.f32 %v878, 0.0
  %v943 = vld [vmem:[#allocation2] sm:$0xff]
  %v944 = vmul.f32 %v65, %v879
  %v945 = vmul.f32 %v66, %v880
  %v946 = vmul.f32 %v67, %v881
  %v947 = vmul.f32 %v68, %v882
  %v948 = vmul.f32 %v69, %v883
  %v949 = vmul.f32 %v70, %v884
  %v950 = vmul.f32 %v71, %v885
  %v951 = vmul.f32 %v72, %v886
  %v952 = vmul.f32 %v73, %v887
  %v953 = vmul.f32 %v74, %v888
  %v954 = vmul.f32 %v75, %v889
  %v955 = vmul.f32 %v76, %v890
  %v956 = vmul.f32 %v77, %v891
  %v957 = vmul.f32 %v78, %v892
  %v958 = vmul.f32 %v79, %v893
  %v959 = vmul.f32 %v80, %v894
  %v960 = vmul.f32 %v81, %v895
  %v961 = vmul.f32 %v82, %v896
  %v962 = vmul.f32 %v83, %v897
  %v963 = vmul.f32 %v84, %v898
  %v964 = vmul.f32 %v85, %v899
  %v965 = vmul.f32 %v86, %v900
  %v966 = vmul.f32 %v87, %v901
  %v967 = vmul.f32 %v88, %v902
  %v968 = vmul.f32 %v89, %v903
  %v969 = vmul.f32 %v90, %v904
  %v970 = vmul.f32 %v91, %v905
  %v971 = vmul.f32 %v92, %v906
  %v972 = vmul.f32 %v93, %v907
  %v973 = vmul.f32 %v94, %v908
  %v974 = vmul.f32 %v95, %v909
  %v975 = vmul.f32 %v96, %v910
  %v976 = vmul.f32 %v97, %v911
  %v977 = vmul.f32 %v98, %v912
  %v978 = vmul.f32 %v99, %v913
  %v979 = vmul.f32 %v100, %v914
  %v980 = vmul.f32 %v101, %v915
  %v981 = vmul.f32 %v102, %v916
  %v982 = vmul.f32 %v103, %v917
  %v983 = vmul.f32 %v104, %v918
  %v984 = vmul.f32 %v105, %v919
  %v985 = vmul.f32 %v106, %v920
  %v986 = vmul.f32 %v107, %v921
  %v987 = vmul.f32 %v108, %v922
  %v988 = vmul.f32 %v109, %v923
  %v989 = vmul.f32 %v110, %v924
  %v990 = vmul.f32 %v111, %v925
  %v991 = vmul.f32 %v112, %v926
  %v992 = vmul.f32 %v113, %v927
  %v993 = vmul.f32 %v114, %v928
  %v994 = vmul.f32 %v115, %v929
  %v995 = vmul.f32 %v116, %v930
  %v996 = vmul.f32 %v117, %v931
  %v997 = vmul.f32 %v118, %v932
  %v998 = vmul.f32 %v119, %v933
  %v999 = vmul.f32 %v120, %v934
  %v1000 = vmul.f32 %v121, %v935
  %v1001 = vmul.f32 %v122, %v936
  %v1002 = vmul.f32 %v123, %v937
  %v1003 = vmul.f32 %v124, %v938
  %v1004 = vmul.f32 %v125, %v939
  %v1005 = vmul.f32 %v126, %v940
  %v1006 = vmul.f32 %v127, %v941
  %v1007 = vmul.f32 %v128, %v942
  %v1008 = vadd.f32 %v944, %v945
  %v1009 = vadd.f32 %v946, %v947
  %v1010 = vadd.f32 %v948, %v949
  %v1011 = vadd.f32 %v950, %v951
  %v1012 = vadd.f32 %v952, %v953
  %v1013 = vadd.f32 %v954, %v955
  %v1014 = vadd.f32 %v956, %v957
  %v1015 = vadd.f32 %v958, %v959
  %v1016 = vadd.f32 %v960, %v961
  %v1017 = vadd.f32 %v962, %v963
  %v1018 = vadd.f32 %v964, %v965
  %v1019 = vadd.f32 %v966, %v967
  %v1020 = vadd.f32 %v968, %v969
  %v1021 = vadd.f32 %v970, %v971
  %v1022 = vadd.f32 %v972, %v973
  %v1023 = vadd.f32 %v974, %v975
  %v1024 = vadd.f32 %v976, %v977
  %v1025 = vadd.f32 %v978, %v979
  %v1026 = vadd.f32 %v980, %v981
  %v1027 = vadd.f32 %v982, %v983
  %v1028 = vadd.f32 %v984, %v985
  %v1029 = vadd.f32 %v986, %v987
  %v1030 = vadd.f32 %v988, %v989
  %v1031 = vadd.f32 %v990, %v991
  %v1032 = vadd.f32 %v992, %v993
  %v1033 = vadd.f32 %v994, %v995
  %v1034 = vadd.f32 %v996, %v997
  %v1035 = vadd.f32 %v998, %v999
  %v1036 = vadd.f32 %v1000, %v1001
  %v1037 = vadd.f32 %v1002, %v1003
  %v1038 = vadd.f32 %v1004, %v1005
  %v1039 = vadd.f32 %v1006, %v1007
  %v1040 = vadd.f32 %v1008, %v1009
  %v1041 = vadd.f32 %v1010, %v1011
  %v1042 = vadd.f32 %v1012, %v1013
  %v1043 = vadd.f32 %v1014, %v1015
  %v1044 = vadd.f32 %v1016, %v1017
  %v1045 = vadd.f32 %v1018, %v1019
  %v1046 = vadd.f32 %v1020, %v1021
  %v1047 = vadd.f32 %v1022, %v1023
  %v1048 = vadd.f32 %v1024, %v1025
  %v1049 = vadd.f32 %v1026, %v1027
  %v1050 = vadd.f32 %v1028, %v1029
  %v1051 = vadd.f32 %v1030, %v1031
  %v1052 = vadd.f32 %v1032, %v1033
  %v1053 = vadd.f32 %v1034, %v1035
  %v1054 = vadd.f32 %v1036, %v1037
  %v1055 = vadd.f32 %v1038, %v1039
  %v1056 = vadd.f32 %v1040, %v1041
  %v1057 = vadd.f32 %v1042, %v1043
  %v1058 = vadd.f32 %v1044, %v1045
  %v1059 = vadd.f32 %v1046, %v1047
  %v1060 = vadd.f32 %v1048, %v1049
  %v1061 = vadd.f32 %v1050, %v1051
  %v1062 = vadd.f32 %v1052, %v1053
  %v1063 = vadd.f32 %v1054, %v1055
  %v1064 = vadd.f32 %v1056, %v1057
  %v1065 = vadd.f32 %v1058, %v1059
  %v1066 = vadd.f32 %v1060, %v1061
  %v1067 = vadd.f32 %v1062, %v1063
  %v1068 = vadd.f32 %v1064, %v1065
  %v1069 = vadd.f32 %v1066, %v1067
  %v1070 = vadd.f32 %v1068, %v1069
  %v1071 = vadd.f32 %v943, %v1070
  %1072 = vst [vmem:[#allocation2] sm:$0xff] %v1071
  // Predicated region
  $region26: #{spectral_cluster_loss.1} parent=0 // pred_check
    %p1073 = pneg %p20
  $region27: #{spectral_cluster_loss.1} parent=0 // pred_check_branch
    %1075 = sbr.rel (%p1073) target = $region29
  $region28: #{spectral_cluster_loss.1} parent=0 // pred_region
    %v1076 = vld [vmem:[#allocation2] sm:$0xff]
    %1077 = vst [vmem:[%s5] sm:$0xff] %v1076
  $region29: #{spectral_cluster_loss.1} parent=0 // pred_fallthru
    _
  // Predicated region
  $region30: #{spectral_cluster_loss.1} parent=0 // pred_check
    _
  $region31: #{spectral_cluster_loss.1} parent=0 // pred_check_branch
    %1079 = sbr.rel (0) target = $region33
  $region32: #{spectral_cluster_loss.1} parent=0 // pred_region
    _
  $region33: #{spectral_cluster_loss.1} parent=0 // pred_fallthru
    _
  // Predicated region
  $region34: #{spectral_cluster_loss.1} parent=0 // pred_check
    _
  $region35: #{spectral_cluster_loss.1} parent=0 // pred_check_branch
    %1081 = sbr.rel (0) target = $region37
  $region36: #{spectral_cluster_loss.1} parent=0 // pred_region
    _
  $region37: #{spectral_cluster_loss.1} parent=0 // pred_fallthru
    _

</llo_original>
